<compile_context>
chip_gen: v5e
topology: v5e:2x2
jax: 0.10.0
libtpu: 0.0.40
codegen_flags: <defaults>
</compile_context>

<pallas_src>
import functools

import jax
import jax.numpy as jnp
import numpy as np
from jax import lax
from jax.experimental import pallas as pl
from jax.experimental.pallas import tpu as pltpu

RRELU_SLOPE = (1.0 / 8.0 + 1.0 / 3.0) / 2.0  # torch.nn.RReLU eval-mode slope
LN_EPS = 1e-5
LANES = 128
TILE_B_MAX = 2048


def _round_up(x, m):
    return ((x + m - 1) // m) * m


def _layernorm(h, gamma, beta):
    mu = jnp.mean(h, axis=-1, keepdims=True)
    var = jnp.mean((h - mu) ** 2, axis=-1, keepdims=True)
    return (h - mu) * lax.rsqrt(var + LN_EPS) * gamma + beta


def _rrelu(h):
    return jnp.where(h >= 0.0, h, h * RRELU_SLOPE)


def _softplus(h):
    # numerically stable softplus; lowers to VPU + EUP ops
    return jnp.maximum(h, 0.0) + jnp.log1p(jnp.exp(-jnp.abs(h)))


def shared_feature_kernel(x_ref, w1_ref, w2_ref, wh_ref, lnp_ref, out_ref, *, out_size):
    """One batch tile: feature MLP + fused (policy|value) head + dist epilogue."""
    hidden = w1_ref.shape[1]
    out_pad = wh_ref.shape[1]
    out_w = out_size + 1
    half = out_size // 2

    x = x_ref[...]

    # packed vector table: rows = [b1, g1, be1, b2, g2, be2, head_bias, 0]
    b1 = lnp_ref[0:1, :hidden]
    g1 = lnp_ref[1:2, :hidden]
    be1 = lnp_ref[2:3, :hidden]
    b2 = lnp_ref[3:4, :hidden]
    g2 = lnp_ref[4:5, :hidden]
    be2 = lnp_ref[5:6, :hidden]
    bh = lnp_ref[6:7, :out_pad]

    # ---- feature layer 1: Linear -> LayerNorm -> RReLU ----
    h = jnp.dot(x, w1_ref[...], preferred_element_type=jnp.float32) + b1
    h = _rrelu(_layernorm(h, g1, be1))

    # ---- feature layer 2: Linear -> LayerNorm -> RReLU ----
    h = jnp.dot(h, w2_ref[...], preferred_element_type=jnp.float32) + b2
    h = _rrelu(_layernorm(h, g2, be2))

    # ---- fused heads: wh = (policy | value | zero pad), bias in packed table ----
    head = jnp.dot(h, wh_ref[...], preferred_element_type=jnp.float32) + bh  # [tile_b, out_pad]
    narrow = head[:, :out_w]                                                 # [tile_b, out_size+1]

    # ---- get_dist epilogue: std lanes -> softplus(.) + 0.05 ----
    lane = lax.broadcasted_iota(jnp.int32, (1, out_w), 1)
    is_std = (lane >= half) & (lane < out_size)
    out_ref[...] = jnp.where(is_std, _softplus(narrow) + 0.05, narrow)


def pack_params(params):
    """One-time packing of call-invariant parameters (hoisted off the hot path)."""
    hidden = params["w1"].shape[1]
    out_size = params["wp"].shape[1]
    out_pad = _round_up(out_size + 1, LANES)
    width = max(hidden, out_pad)

    def row(v):
        v = jnp.asarray(v, jnp.float32).reshape(1, -1)
        return jnp.pad(v, ((0, 0), (0, width - v.shape[1])))

    head_bias = jnp.concatenate(
        [jnp.asarray(params["bp"], jnp.float32).reshape(1, -1),
         jnp.asarray(params["bv"], jnp.float32).reshape(1, -1)], axis=1)

    lnp = jnp.concatenate(
        [row(params["b1"]), row(params["g1"]), row(params["be1"]),
         row(params["b2"]), row(params["g2"]), row(params["be2"]),
         row(head_bias), jnp.zeros((1, width), jnp.float32)],
        axis=0,
    )  # [8, width]

    wh = jnp.zeros((hidden, out_pad), jnp.float32)
    wh = wh.at[:, :out_size].set(params["wp"])
    wh = wh.at[:, out_size:out_size + 1].set(params["wv"])

    return {
        "w1": jnp.asarray(params["w1"], jnp.float32),
        "w2": jnp.asarray(params["w2"], jnp.float32),
        "wh": wh,
        "lnp": lnp,
    }


@functools.partial(jax.jit, static_argnames=("out_size",))
def shared_feature_forward(state, packed, out_size):
    """Returns (policy_mean, policy_std, value) — the Normal dist params + value."""
    state = state.astype(jnp.float32)
    B, in_size = state.shape
    hidden = packed["w1"].shape[1]
    out_pad = packed["wh"].shape[1]
    width = packed["lnp"].shape[1]
    out_w = out_size + 1

    # ---- batch tiling: 8-row-aligned tile, ragged last block, >=2 steps when possible ----
    b8 = _round_up(max(B, 1), 8)
    if b8 >= 16:
        tile_b = min(TILE_B_MAX, _round_up(pl.cdiv(b8, 2), 8))
    else:
        tile_b = b8
    grid = (pl.cdiv(B, tile_b),)

    cost = pl.CostEstimate(
        flops=int(2 * B * (in_size * hidden + hidden * hidden + hidden * out_pad)),
        transcendentals=int(2 * B * out_w),
        bytes_accessed=int(4 * (B * (in_size + out_w)
                                + in_size * hidden + hidden * hidden
                                + hidden * out_pad + 8 * width)),
    )

    out = pl.pallas_call(
        functools.partial(shared_feature_kernel, out_size=out_size),
        out_shape=jax.ShapeDtypeStruct((B, out_w), jnp.float32),
        grid=grid,
        in_specs=[
            pl.BlockSpec((tile_b, in_size), lambda i: (i, 0)),    # state tile
            pl.BlockSpec((in_size, hidden), lambda i: (0, 0)),    # w1 (pinned)
            pl.BlockSpec((hidden, hidden), lambda i: (0, 0)),     # w2 (pinned)
            pl.BlockSpec((hidden, out_pad), lambda i: (0, 0)),    # fused heads (pinned)
            pl.BlockSpec((8, width), lambda i: (0, 0)),           # packed LN/bias table
        ],
        out_specs=pl.BlockSpec((tile_b, out_w), lambda i: (i, 0)),
        compiler_params=pltpu.CompilerParams(
            dimension_semantics=("parallel",),  # shard batch tiles across TCs (v7x)
        ),
        cost_estimate=cost,
    )(state, packed["w1"], packed["w2"], packed["wh"], packed["lnp"])

    half = out_size // 2
    mean = out[:, :half]
    std = out[:, half:out_size]
    value = out[:, out_size:out_size + 1]
    return mean, std, value


def init_params(key, in_size, hidden_size, out_size):
    ks = jax.random.split(key, 8)
    scale = 0.1

    def lin(kw, kb, fan_in, fan_out):
        w = scale * jax.random.normal(kw, (fan_in, fan_out), jnp.float32)
        b = scale * jax.random.normal(kb, (1, fan_out), jnp.float32)
        return w, b

    w1, b1 = lin(ks[0], ks[1], in_size, hidden_size)
    w2, b2 = lin(ks[2], ks[3], hidden_size, hidden_size)
    # policy head: xavier_normal_ with gain 0.01
    xav = 0.01 * np.sqrt(2.0 / (hidden_size + out_size))
    wp = xav * jax.random.normal(ks[4], (hidden_size, out_size), jnp.float32)
    bp = jnp.zeros((1, out_size), jnp.float32)
    wv, bv = lin(ks[5], ks[6], hidden_size, 1)

    return {
        "w1": w1, "b1": b1,
        "g1": jnp.ones((1, hidden_size), jnp.float32),
        "be1": jnp.zeros((1, hidden_size), jnp.float32),
        "w2": w2, "b2": b2,
        "g2": jnp.ones((1, hidden_size), jnp.float32),
        "be2": jnp.zeros((1, hidden_size), jnp.float32),
        "wp": wp, "bp": bp,
        "wv": wv, "bv": bv,
    }


def reference_forward(state, params, out_size):
    def ln(h, g, b):
        mu = h.mean(-1, keepdims=True)
        var = ((h - mu) ** 2).mean(-1, keepdims=True)
        return (h - mu) / np.sqrt(var + LN_EPS) * g + b

    def rrelu(h):
        return np.where(h >= 0, h, h * RRELU_SLOPE)

    def softplus(h):
        return np.maximum(h, 0.0) + np.log1p(np.exp(-np.abs(h)))

    p = {k: np.asarray(v) for k, v in params.items()}
    h = rrelu(ln(state @ p["w1"] + p["b1"], p["g1"], p["be1"]))
    h = rrelu(ln(h @ p["w2"] + p["b2"], p["g2"], p["be2"]))
    logits = h @ p["wp"] + p["bp"]
    value = h @ p["wv"] + p["bv"]
    half = out_size // 2
    mean = logits[:, :half]
    std = softplus(logits[:, half:]) + 0.05
    return mean, std, value


if __name__ == "__main__":
    # Box observation space shape (4,), Box action space shape (2,) -> out_size = 4.
    # hidden = 128 matches the module default and is lane-dense.
    in_size, hidden, act_dim = 4, 128, 2
    out_size = act_dim * 2

    key = jax.random.PRNGKey(0)
    k_param, k_state = jax.random.split(key)
    params = init_params(k_param, in_size, hidden, out_size)
    packed = pack_params(params)  # one-time packing, off the per-call hot path

    # small canonical batch + a ragged multi-tile batch (exercises cdiv grid / partial block)
    for batch in (8, 20):
        state = jax.random.normal(jax.random.fold_in(k_state, batch),
                                  (batch, in_size), jnp.float32)
        mean, std, value = shared_feature_forward(state, packed, out_size)
        jax.block_until_ready((mean, std, value))

        ref_mean, ref_std, ref_value = reference_forward(np.asarray(state), params, out_size)
        np.testing.assert_allclose(np.asarray(mean), ref_mean, rtol=1e-4, atol=1e-5)
        np.testing.assert_allclose(np.asarray(std), ref_std, rtol=1e-4, atol=1e-5)
        np.testing.assert_allclose(np.asarray(value), ref_value, rtol=1e-4, atol=1e-5)

    print("KERNEL_OK")
</pallas_src>

<mosaic_0001>
module attributes {stable_mosaic.version = 11 : i64} {
  func.func @shared_feature_kernel(%arg0: i32, %arg1: memref<8x4xf32, #tpu.memory_space<vmem>>, %arg2: memref<4x128xf32, #tpu.memory_space<vmem>>, %arg3: memref<128x128xf32, #tpu.memory_space<vmem>>, %arg4: memref<128x128xf32, #tpu.memory_space<vmem>>, %arg5: memref<8x128xf32, #tpu.memory_space<vmem>>, %arg6: memref<8x5xf32, #tpu.memory_space<vmem>>) attributes {dimension_semantics = [#tpu.dimension_semantics<parallel>], iteration_bounds = array<i64: 1>, scalar_prefetch = 0 : i64, scratch_operands = 0 : i64, tpu.core_type = #tpu.core_type<tc>, window_params = [{transform_indices = @transform_0, window_bounds = array<i64: 8, 4>}, {pipeline_mode = #tpu.pipeline_mode<synchronous>, transform_indices = @transform_1, window_bounds = array<i64: 4, 128>}, {pipeline_mode = #tpu.pipeline_mode<synchronous>, transform_indices = @transform_2, window_bounds = array<i64: 128, 128>}, {pipeline_mode = #tpu.pipeline_mode<synchronous>, transform_indices = @transform_3, window_bounds = array<i64: 128, 128>}, {pipeline_mode = #tpu.pipeline_mode<synchronous>, transform_indices = @transform_4, window_bounds = array<i64: 8, 128>}, {transform_indices = @transform_5, window_bounds = array<i64: 8, 5>}]} {
    %c0 = arith.constant 0 : index
    %c0_0 = arith.constant 0 : index
    %0 = vector.load %arg1[%c0, %c0_0] : memref<8x4xf32, #tpu.memory_space<vmem>>, vector<8x4xf32>
    %c0_1 = arith.constant 0 : index
    %c0_2 = arith.constant 0 : index
    %1 = vector.load %arg5[%c0_1, %c0_2] : memref<8x128xf32, #tpu.memory_space<vmem>>, vector<1x128xf32>
    %c1 = arith.constant 1 : index
    %c0_3 = arith.constant 0 : index
    %2 = vector.load %arg5[%c1, %c0_3] : memref<8x128xf32, #tpu.memory_space<vmem>>, vector<1x128xf32>
    %c2 = arith.constant 2 : index
    %c0_4 = arith.constant 0 : index
    %3 = vector.load %arg5[%c2, %c0_4] : memref<8x128xf32, #tpu.memory_space<vmem>>, vector<1x128xf32>
    %c3 = arith.constant 3 : index
    %c0_5 = arith.constant 0 : index
    %4 = vector.load %arg5[%c3, %c0_5] : memref<8x128xf32, #tpu.memory_space<vmem>>, vector<1x128xf32>
    %c4 = arith.constant 4 : index
    %c0_6 = arith.constant 0 : index
    %5 = vector.load %arg5[%c4, %c0_6] : memref<8x128xf32, #tpu.memory_space<vmem>>, vector<1x128xf32>
    %c5 = arith.constant 5 : index
    %c0_7 = arith.constant 0 : index
    %6 = vector.load %arg5[%c5, %c0_7] : memref<8x128xf32, #tpu.memory_space<vmem>>, vector<1x128xf32>
    %c6 = arith.constant 6 : index
    %c0_8 = arith.constant 0 : index
    %7 = vector.load %arg5[%c6, %c0_8] : memref<8x128xf32, #tpu.memory_space<vmem>>, vector<1x128xf32>
    %c0_9 = arith.constant 0 : index
    %c0_10 = arith.constant 0 : index
    %8 = vector.load %arg2[%c0_9, %c0_10] : memref<4x128xf32, #tpu.memory_space<vmem>>, vector<4x128xf32>
    %cst = arith.constant dense<0.000000e+00> : vector<8x128xf32>
    %9 = tpu.matmul %0, %8, %cst {dimension_numbers = #tpu.dot_dimension_numbers<[1], [0], [0], [1], [0, 0, 1, 1], [], []>} : vector<8x4xf32>, vector<4x128xf32>, vector<8x128xf32> -> vector<8x128xf32>
    %10 = vector.broadcast %1 : vector<1x128xf32> to vector<8x128xf32>
    %11 = arith.addf %9, %10 : vector<8x128xf32>
    %cst_11 = arith.constant dense<0.000000e+00> : vector<8xf32>
    %12 = vector.multi_reduction <add>, %11, %cst_11 [1] : vector<8x128xf32> to vector<8xf32>
    %13 = vector.shape_cast %12 : vector<8xf32> to vector<8x1xf32>
    %cst_12 = arith.constant 1.280000e+02 : f32
    %14 = vector.broadcast %cst_12 : f32 to vector<8x1xf32>
    %15 = arith.divf %13, %14 : vector<8x1xf32>
    %16 = vector.broadcast %15 : vector<8x1xf32> to vector<8x128xf32>
    %17 = arith.subf %11, %16 : vector<8x128xf32>
    %18 = arith.mulf %17, %17 : vector<8x128xf32>
    %cst_13 = arith.constant dense<0.000000e+00> : vector<8xf32>
    %19 = vector.multi_reduction <add>, %18, %cst_13 [1] : vector<8x128xf32> to vector<8xf32>
    %20 = vector.shape_cast %19 : vector<8xf32> to vector<8x1xf32>
    %cst_14 = arith.constant 1.280000e+02 : f32
    %21 = vector.broadcast %cst_14 : f32 to vector<8x1xf32>
    %22 = arith.divf %20, %21 : vector<8x1xf32>
    %23 = vector.broadcast %15 : vector<8x1xf32> to vector<8x128xf32>
    %24 = arith.subf %11, %23 : vector<8x128xf32>
    %cst_15 = arith.constant 9.99999974E-6 : f32
    %25 = vector.broadcast %cst_15 : f32 to vector<8x1xf32>
    %26 = arith.addf %22, %25 : vector<8x1xf32>
    %27 = math.rsqrt %26 : vector<8x1xf32>
    %28 = vector.broadcast %27 : vector<8x1xf32> to vector<8x128xf32>
    %29 = arith.mulf %24, %28 : vector<8x128xf32>
    %30 = vector.broadcast %2 : vector<1x128xf32> to vector<8x128xf32>
    %31 = arith.mulf %29, %30 : vector<8x128xf32>
    %32 = vector.broadcast %3 : vector<1x128xf32> to vector<8x128xf32>
    %33 = arith.addf %31, %32 : vector<8x128xf32>
    %cst_16 = arith.constant 0.000000e+00 : f32
    %34 = vector.broadcast %cst_16 : f32 to vector<8x128xf32>
    %35 = arith.cmpf oge, %33, %34 : vector<8x128xf32>
    %cst_17 = arith.constant 0.229166672 : f32
    %36 = vector.broadcast %cst_17 : f32 to vector<8x128xf32>
    %37 = arith.mulf %33, %36 : vector<8x128xf32>
    %38 = arith.select %35, %33, %37 : vector<8x128xi1>, vector<8x128xf32>
    %c0_18 = arith.constant 0 : index
    %c0_19 = arith.constant 0 : index
    %39 = vector.load %arg3[%c0_18, %c0_19] : memref<128x128xf32, #tpu.memory_space<vmem>>, vector<128x128xf32>
    %cst_20 = arith.constant dense<0.000000e+00> : vector<8x128xf32>
    %40 = tpu.matmul %38, %39, %cst_20 {dimension_numbers = #tpu.dot_dimension_numbers<[1], [0], [0], [1], [0, 0, 1, 1], [], []>} : vector<8x128xf32>, vector<128x128xf32>, vector<8x128xf32> -> vector<8x128xf32>
    %41 = vector.broadcast %4 : vector<1x128xf32> to vector<8x128xf32>
    %42 = arith.addf %40, %41 : vector<8x128xf32>
    %cst_21 = arith.constant dense<0.000000e+00> : vector<8xf32>
    %43 = vector.multi_reduction <add>, %42, %cst_21 [1] : vector<8x128xf32> to vector<8xf32>
    %44 = vector.shape_cast %43 : vector<8xf32> to vector<8x1xf32>
    %cst_22 = arith.constant 1.280000e+02 : f32
    %45 = vector.broadcast %cst_22 : f32 to vector<8x1xf32>
    %46 = arith.divf %44, %45 : vector<8x1xf32>
    %47 = vector.broadcast %46 : vector<8x1xf32> to vector<8x128xf32>
    %48 = arith.subf %42, %47 : vector<8x128xf32>
    %49 = arith.mulf %48, %48 : vector<8x128xf32>
    %cst_23 = arith.constant dense<0.000000e+00> : vector<8xf32>
    %50 = vector.multi_reduction <add>, %49, %cst_23 [1] : vector<8x128xf32> to vector<8xf32>
    %51 = vector.shape_cast %50 : vector<8xf32> to vector<8x1xf32>
    %cst_24 = arith.constant 1.280000e+02 : f32
    %52 = vector.broadcast %cst_24 : f32 to vector<8x1xf32>
    %53 = arith.divf %51, %52 : vector<8x1xf32>
    %54 = vector.broadcast %46 : vector<8x1xf32> to vector<8x128xf32>
    %55 = arith.subf %42, %54 : vector<8x128xf32>
    %cst_25 = arith.constant 9.99999974E-6 : f32
    %56 = vector.broadcast %cst_25 : f32 to vector<8x1xf32>
    %57 = arith.addf %53, %56 : vector<8x1xf32>
    %58 = math.rsqrt %57 : vector<8x1xf32>
    %59 = vector.broadcast %58 : vector<8x1xf32> to vector<8x128xf32>
    %60 = arith.mulf %55, %59 : vector<8x128xf32>
    %61 = vector.broadcast %5 : vector<1x128xf32> to vector<8x128xf32>
    %62 = arith.mulf %60, %61 : vector<8x128xf32>
    %63 = vector.broadcast %6 : vector<1x128xf32> to vector<8x128xf32>
    %64 = arith.addf %62, %63 : vector<8x128xf32>
    %cst_26 = arith.constant 0.000000e+00 : f32
    %65 = vector.broadcast %cst_26 : f32 to vector<8x128xf32>
    %66 = arith.cmpf oge, %64, %65 : vector<8x128xf32>
    %cst_27 = arith.constant 0.229166672 : f32
    %67 = vector.broadcast %cst_27 : f32 to vector<8x128xf32>
    %68 = arith.mulf %64, %67 : vector<8x128xf32>
    %69 = arith.select %66, %64, %68 : vector<8x128xi1>, vector<8x128xf32>
    %c0_28 = arith.constant 0 : index
    %c0_29 = arith.constant 0 : index
    %70 = vector.load %arg4[%c0_28, %c0_29] : memref<128x128xf32, #tpu.memory_space<vmem>>, vector<128x128xf32>
    %cst_30 = arith.constant dense<0.000000e+00> : vector<8x128xf32>
    %71 = tpu.matmul %69, %70, %cst_30 {dimension_numbers = #tpu.dot_dimension_numbers<[1], [0], [0], [1], [0, 0, 1, 1], [], []>} : vector<8x128xf32>, vector<128x128xf32>, vector<8x128xf32> -> vector<8x128xf32>
    %72 = vector.broadcast %7 : vector<1x128xf32> to vector<8x128xf32>
    %73 = arith.addf %71, %72 : vector<8x128xf32>
    %74 = vector.extract_strided_slice %73 {offsets = [0, 0], sizes = [8, 5], strides = [1, 1]} : vector<8x128xf32> to vector<8x5xf32>
    %75 = tpu.iota {dimensions = array<i32: 1>} : vector<1x5xi32>
    %c2_i32 = arith.constant 2 : i32
    %76 = vector.broadcast %c2_i32 : i32 to vector<1x5xi32>
    %77 = arith.cmpi sge, %75, %76 : vector<1x5xi32>
    %c4_i32 = arith.constant 4 : i32
    %78 = vector.broadcast %c4_i32 : i32 to vector<1x5xi32>
    %79 = arith.cmpi slt, %75, %78 : vector<1x5xi32>
    %80 = arith.andi %77, %79 : vector<1x5xi1>
    %cst_31 = arith.constant 0.000000e+00 : f32
    %81 = vector.broadcast %cst_31 : f32 to vector<8x5xf32>
    %82 = arith.maximumf %74, %81 : vector<8x5xf32>
    %83 = math.absf %74 : vector<8x5xf32>
    %cst_32 = arith.constant 0.000000e+00 : f32
    %84 = vector.broadcast %cst_32 : f32 to vector<8x5xf32>
    %85 = arith.subf %84, %83 : vector<8x5xf32>
    %86 = math.exp %85 : vector<8x5xf32>
    %87 = math.log1p %86 : vector<8x5xf32>
    %88 = arith.addf %82, %87 : vector<8x5xf32>
    %cst_33 = arith.constant 5.000000e-02 : f32
    %89 = vector.broadcast %cst_33 : f32 to vector<8x5xf32>
    %90 = arith.addf %88, %89 : vector<8x5xf32>
    %91 = vector.shape_cast %80 : vector<1x5xi1> to vector<1x5xi1>
    %92 = vector.broadcast %91 : vector<1x5xi1> to vector<8x5xi1>
    %93 = arith.select %92, %90, %74 : vector<8x5xi1>, vector<8x5xf32>
    %c0_34 = arith.constant 0 : index
    %c0_35 = arith.constant 0 : index
    %94 = vector.load %arg6[%c0_34, %c0_35] : memref<8x5xf32, #tpu.memory_space<vmem>>, vector<8x5xf32>
    tpu.vector_store %arg6[%c0_34, %c0_35], %93 {strides = array<i32>} : memref<8x5xf32, #tpu.memory_space<vmem>>, vector<8x5xf32>,
    return
  }
  func.func @transform_0(%arg0: i32) -> (i32, i32) {
    %c0_i32 = arith.constant 0 : i32
    %c0_i32_0 = arith.constant 0 : i32
    return %arg0, %c0_i32 : i32, i32
  }
  func.func @transform_1(%arg0: i32) -> (i32, i32) {
    %c0_i32 = arith.constant 0 : i32
    %c0_i32_0 = arith.constant 0 : i32
    %c0_i32_1 = arith.constant 0 : i32
    return %c0_i32, %c0_i32_0 : i32, i32
  }
  func.func @transform_2(%arg0: i32) -> (i32, i32) {
    %c0_i32 = arith.constant 0 : i32
    %c0_i32_0 = arith.constant 0 : i32
    %c0_i32_1 = arith.constant 0 : i32
    return %c0_i32, %c0_i32_0 : i32, i32
  }
  func.func @transform_3(%arg0: i32) -> (i32, i32) {
    %c0_i32 = arith.constant 0 : i32
    %c0_i32_0 = arith.constant 0 : i32
    %c0_i32_1 = arith.constant 0 : i32
    return %c0_i32, %c0_i32_0 : i32, i32
  }
  func.func @transform_4(%arg0: i32) -> (i32, i32) {
    %c0_i32 = arith.constant 0 : i32
    %c0_i32_0 = arith.constant 0 : i32
    %c0_i32_1 = arith.constant 0 : i32
    return %c0_i32, %c0_i32_0 : i32, i32
  }
  func.func @transform_5(%arg0: i32) -> (i32, i32) {
    %c0_i32 = arith.constant 0 : i32
    %c0_i32_0 = arith.constant 0 : i32
    return %arg0, %c0_i32 : i32, i32
  }
}

</mosaic_0001>

<llo_original>
// kernel: shared_feature_forward.1
$region0: #{shared_feature_forward.1}
  #allocation0 [shape = 'u32[]', space=smem, size = 0x4, offset = 0x4, fixed_abs, tag = 'smem constant byte address 0x4 - core index']
  #allocation1 [shape = 'u32[72,128]{1,0:T(1,128)}', space=vmem, size = 0x9000, scoped, tag = 'internal scratch']
  %s0 = inlined_call_operand.vmem [shape: f32[8,4], index: 0, kind: input, shape index: {}]
  %s1 = inlined_call_operand.vmem [shape: f32[4,128], index: 1, kind: input, shape index: {}]
  %s2 = inlined_call_operand.hbm [shape: f32[128,128], index: 2, kind: input, shape index: {}]
  %s3 = inlined_call_operand.hbm [shape: f32[128,128], index: 3, kind: input, shape index: {}]
  %s4 = inlined_call_operand.vmem [shape: f32[8,128], index: 4, kind: input, shape index: {}]
  %s5 = inlined_call_operand.vmem [shape: f32[8,5], index: 5, kind: output, shape index: {}]
  %s6 = sld [smem:[#allocation0]]
  $region38: #{shared_feature_forward.1} parent=0
    _
  %s8 = ssub.s32 1, %s6
  %s9 = scalar_select 0, %s8, %s6
  $region1: #{shared_feature_forward.1} parent=0
    #allocation2 [shape = 'u8[65536]{0}', space=vmem, size = 0x10000, scoped, tag = 'input window, operand 2, single buffered']
    #allocation3 [shape = 's32[1]{0}', space=sflag, size = 0x4, scoped, tag = 'scoped memory for shared_feature_forward.1']
    #allocation4 [shape = 'u8[65536]{0}', space=vmem, size = 0x10000, scoped, tag = 'input window, operand 3, single buffered']
    #allocation5 [shape = 's32[1]{0}', space=sflag, size = 0x4, scoped, tag = 'scoped memory for shared_feature_forward.1']
    %10 = vsyncpa [#allocation3], 0
    %11 = vsyncpa [#allocation5], 0
    // Predicated region
    $region2: #{shared_feature_forward.1} parent=1 // pred_check
      _
    $region3: #{shared_feature_forward.1} parent=1 // pred_check_branch
      %13 = sbr.rel (0) target = $region5
    $region4: #{shared_feature_forward.1} parent=1 // pred_region
      _
    $region5: #{shared_feature_forward.1} parent=1 // pred_fallthru
      _
    // Predicated region
    $region6: #{shared_feature_forward.1} parent=1 // pred_check
      _
    $region7: #{shared_feature_forward.1} parent=1 // pred_check_branch
      %15 = sbr.rel (0) target = $region9
    $region8: #{shared_feature_forward.1} parent=1 // pred_region
      _
    $region9: #{shared_feature_forward.1} parent=1 // pred_fallthru
      _
    // Predicated region
    $region10: #{shared_feature_forward.1} parent=1 // pred_check
      _
    $region11: #{shared_feature_forward.1} parent=1 // pred_check_branch
      %17 = sbr.rel (0) target = $region13
    $region12: #{shared_feature_forward.1} parent=1 // pred_region
      %19 = vsyncadd [#allocation3], 0
      %s20 = sshll.u32 %s2, 4
      %s21 = int_to_ptr.hbm [resolvable:$true] %s20
      %s22 = sshll.u32 [#allocation2], 4
      %s23 = int_to_ptr.vmem [resolvable:$true] %s22
      %28 = dma.hbm_to_vmem [thread:$0]  %s21, 2048, %s23, [#allocation3], 128, 128, 8
    $region13: #{shared_feature_forward.1} parent=1 // pred_fallthru
      _
    // Predicated region
    $region14: #{shared_feature_forward.1} parent=1 // pred_check
      _
    $region15: #{shared_feature_forward.1} parent=1 // pred_check_branch
      %30 = sbr.rel (0) target = $region17
    $region16: #{shared_feature_forward.1} parent=1 // pred_region
      %32 = vsyncadd [#allocation5], 0
      %s33 = sshll.u32 %s3, 4
      %s34 = int_to_ptr.hbm [resolvable:$true] %s33
      %s35 = sshll.u32 [#allocation4], 4
      %s36 = int_to_ptr.vmem [resolvable:$true] %s35
      %41 = dma.hbm_to_vmem [thread:$0]  %s34, 2048, %s36, [#allocation5], 128, 128, 8
    $region17: #{shared_feature_forward.1} parent=1 // pred_fallthru
      _
    // Predicated region
    $region18: #{shared_feature_forward.1} parent=1 // pred_check
      _
    $region19: #{shared_feature_forward.1} parent=1 // pred_check_branch
      %43 = sbr.rel (0) target = $region21
    $region20: #{shared_feature_forward.1} parent=1 // pred_region
      _
    $region21: #{shared_feature_forward.1} parent=1 // pred_fallthru
      _
    // Predicated region
    $region22: #{shared_feature_forward.1} parent=1 // pred_check
      _
    $region23: #{shared_feature_forward.1} parent=1 // pred_check_branch
      %45 = sbr.rel (0) target = $region25
    $region24: #{shared_feature_forward.1} parent=1 // pred_region
      %47 = dma.done [#allocation3], 2048
    $region25: #{shared_feature_forward.1} parent=1 // pred_fallthru
      _
    // Predicated region
    $region26: #{shared_feature_forward.1} parent=1 // pred_check
      _
    $region27: #{shared_feature_forward.1} parent=1 // pred_check_branch
      %49 = sbr.rel (0) target = $region29
    $region28: #{shared_feature_forward.1} parent=1 // pred_region
      %51 = dma.done [#allocation5], 2048
    $region29: #{shared_feature_forward.1} parent=1 // pred_fallthru
      _
    %v52 = vld [vmem:[%s0] sm:$0xff]
    %v53 = vld [vmem:[%s4] sm:$0x1]
    %v54 = vld [vmem:[%s4 + $0x1] sm:$0x1]
    %v55 = vld [vmem:[%s4 + $0x2] sm:$0x1]
    %v56 = vld [vmem:[%s4 + $0x3] sm:$0x1]
    %v57 = vld [vmem:[%s4 + $0x4] sm:$0x1]
    %v58 = vld [vmem:[%s4 + $0x5] sm:$0x1]
    %v59 = vld [vmem:[%s4 + $0x6] sm:$0x1]
    %v60 = vld [vmem:[%s1] sm:$0xf]
    %v61 = vperm.slane %v53, 0
    %vm62 = vcmask 31744
    %v64 = vsel %vm62, %v52, 0
    %vm66 = vcmask 1043456
    %v68 = vsel %vm66, %v60, 0
    %70 = vmatpush.msra.mxu0 0.0
    %71 = vmatpush.msra.mxu0 0.0
    %72 = vmatpush.msra.mxu0 0.0
    %73 = vmatpush.msra.mxu0 0.0
    %74 = vmatpush.msra.mxu0 0.0
    %75 = vmatpush.msra.mxu0 0.0
    %76 = vmatpush.msra.mxu0 0.0
    %77 = vmatpush.msra.mxu0 0.0
    %78 = vmatpush.msra.mxu0 0.0
    %79 = vmatpush.msra.mxu0 0.0
    %80 = vmatpush.msra.mxu0 0.0
    %81 = vmatpush.msra.mxu0 0.0
    %82 = vmatpush.msra.mxu0 0.0
    %83 = vmatpush.msra.mxu0 0.0
    %84 = vmatpush.msra.mxu0 0.0
    %85 = vmatpush.msra.mxu0 %v68
    %86 = vmatmul.f32.gmra.mxu0 %v64
    %v87 = vpop.f32.mrf.mxu0
    %v88 = vadd.f32 %v61, %v87
    %89 = vdwg.mxu0
    %90 = vadd.xlane.f32.xlu0 %v88
    %v91 = vpop.xlane.xlu0 %90
    %v92 = vrcp.pop 128.0
    %v93 = vmul.f32 128.0, %v92
    %v94 = vsub.f32 1.0, %v93
    %v95 = vmul.f32 %v92, %v94
    %v96 = vadd.f32 %v92, %v95
    %vm97 = vweird.f32 %v92
    %v98 = vsel %vm97, %v92, %v96
    %v99 = vmul.f32 %v91, %v98
    %v100 = vsub.f32 %v88, %v99
    %v101 = vmul.f32 %v100, %v100
    %102 = vadd.xlane.f32.xlu0 %v101
    %v103 = vpop.xlane.xlu0 %102
    %v104 = vmul.f32 %v103, %v98
    %v105 = vadd.f32 %v104, 1e-05
    %v106 = vrsqrt.pop %v105
    %v107 = vmul.f32 %v106, %v105
    %v108 = vmul.f32 %v107, %v106
    %v109 = vmul.f32 0.5, %v108
    %v110 = vsub.f32 1.5, %v109
    %v111 = vmul.f32 %v106, %v110
    %vm112 = vweird.f32 %v105
    %vm113 = vweird.f32 %v106
    %vm114 = vmor %vm112, %vm113
    %v115 = vsel %vm114, %v106, %v111
    %v116 = vmul.f32 %v100, %v115
    %v117 = vperm.slane %v54, 0
    %v118 = vmul.f32 %v116, %v117
    %v119 = vperm.slane %v55, 0
    %v120 = vadd.f32 %v118, %v119
    %vm121 = vcmp.ge.f32.partialorder %v120, 0.0
    %v122 = vmul.f32 %v120, 0.22916667
    %v123 = vsel %vm121, %v120, %v122
    %v124 = vld [vmem:[#allocation2] sm:$0xff]
    %v125 = vld [vmem:[#allocation2 + $0x8] sm:$0xff]
    %v126 = vld [vmem:[#allocation2 + $0x10] sm:$0xff]
    %v127 = vld [vmem:[#allocation2 + $0x18] sm:$0xff]
    %v128 = vld [vmem:[#allocation2 + $0x20] sm:$0xff]
    %v129 = vld [vmem:[#allocation2 + $0x28] sm:$0xff]
    %v130 = vld [vmem:[#allocation2 + $0x30] sm:$0xff]
    %v131 = vld [vmem:[#allocation2 + $0x38] sm:$0xff]
    %v132 = vld [vmem:[#allocation2 + $0x40] sm:$0xff]
    %v133 = vld [vmem:[#allocation2 + $0x48] sm:$0xff]
    %v134 = vld [vmem:[#allocation2 + $0x50] sm:$0xff]
    %v135 = vld [vmem:[#allocation2 + $0x58] sm:$0xff]
    %v136 = vld [vmem:[#allocation2 + $0x60] sm:$0xff]
    %v137 = vld [vmem:[#allocation2 + $0x68] sm:$0xff]
    %v138 = vld [vmem:[#allocation2 + $0x70] sm:$0xff]
    %v139 = vld [vmem:[#allocation2 + $0x78] sm:$0xff]
    %v140 = vperm.slane %v56, 0
    %141 = vmatpush.msra.mxu0 %v139
    %142 = vmatpush.msra.mxu0 %v138
    %143 = vmatpush.msra.mxu0 %v137
    %144 = vmatpush.msra.mxu0 %v136
    %145 = vmatpush.msra.mxu0 %v135
    %146 = vmatpush.msra.mxu0 %v134
    %147 = vmatpush.msra.mxu0 %v133
    %148 = vmatpush.msra.mxu0 %v132
    %149 = vmatpush.msra.mxu0 %v131
    %150 = vmatpush.msra.mxu0 %v130
    %151 = vmatpush.msra.mxu0 %v129
    %152 = vmatpush.msra.mxu0 %v128
    %153 = vmatpush.msra.mxu0 %v127
    %154 = vmatpush.msra.mxu0 %v126
    %155 = vmatpush.msra.mxu0 %v125
    %156 = vmatpush.msra.mxu0 %v124
    %157 = vmatmul.f32.gmra.mxu0 %v123
    %v158 = vpop.f32.mrf.mxu0
    %v159 = vadd.f32 %v140, %v158
    %160 = vdwg.mxu0
    %161 = vadd.xlane.f32.xlu0 %v159
    %v162 = vpop.xlane.xlu0 %161
    %v163 = vmul.f32 %v162, %v98
    %v164 = vsub.f32 %v159, %v163
    %v165 = vmul.f32 %v164, %v164
    %166 = vadd.xlane.f32.xlu0 %v165
    %v167 = vpop.xlane.xlu0 %166
    %v168 = vmul.f32 %v167, %v98
    %v169 = vadd.f32 %v168, 1e-05
    %v170 = vrsqrt.pop %v169
    %v171 = vmul.f32 %v170, %v169
    %v172 = vmul.f32 %v171, %v170
    %v173 = vmul.f32 0.5, %v172
    %v174 = vsub.f32 1.5, %v173
    %v175 = vmul.f32 %v170, %v174
    %vm176 = vweird.f32 %v169
    %vm177 = vweird.f32 %v170
    %vm178 = vmor %vm176, %vm177
    %v179 = vsel %vm178, %v170, %v175
    %v180 = vmul.f32 %v164, %v179
    %v181 = vperm.slane %v57, 0
    %v182 = vmul.f32 %v180, %v181
    %v183 = vperm.slane %v58, 0
    %v184 = vadd.f32 %v182, %v183
    %vm185 = vcmp.ge.f32.partialorder %v184, 0.0
    %v186 = vmul.f32 %v184, 0.22916667
    %v187 = vsel %vm185, %v184, %v186
    %v188 = vld [vmem:[#allocation4] sm:$0xff]
    %v189 = vld [vmem:[#allocation4 + $0x8] sm:$0xff]
    %v190 = vld [vmem:[#allocation4 + $0x10] sm:$0xff]
    %v191 = vld [vmem:[#allocation4 + $0x18] sm:$0xff]
    %v192 = vld [vmem:[#allocation4 + $0x20] sm:$0xff]
    %v193 = vld [vmem:[#allocation4 + $0x28] sm:$0xff]
    %v194 = vld [vmem:[#allocation4 + $0x30] sm:$0xff]
    %v195 = vld [vmem:[#allocation4 + $0x38] sm:$0xff]
    %v196 = vld [vmem:[#allocation4 + $0x40] sm:$0xff]
    %v197 = vld [vmem:[#allocation4 + $0x48] sm:$0xff]
    %v198 = vld [vmem:[#allocation4 + $0x50] sm:$0xff]
    %v199 = vld [vmem:[#allocation4 + $0x58] sm:$0xff]
    %v200 = vld [vmem:[#allocation4 + $0x60] sm:$0xff]
    %v201 = vld [vmem:[#allocation4 + $0x68] sm:$0xff]
    %v202 = vld [vmem:[#allocation4 + $0x70] sm:$0xff]
    %v203 = vld [vmem:[#allocation4 + $0x78] sm:$0xff]
    %v204 = vperm.slane %v59, 0
    %205 = vmatpush.msra.mxu0 %v203
    %206 = vmatpush.msra.mxu0 %v202
    %207 = vmatpush.msra.mxu0 %v201
    %208 = vmatpush.msra.mxu0 %v200
    %209 = vmatpush.msra.mxu0 %v199
    %210 = vmatpush.msra.mxu0 %v198
    %211 = vmatpush.msra.mxu0 %v197
    %212 = vmatpush.msra.mxu0 %v196
    %213 = vmatpush.msra.mxu0 %v195
    %214 = vmatpush.msra.mxu0 %v194
    %215 = vmatpush.msra.mxu0 %v193
    %216 = vmatpush.msra.mxu0 %v192
    %217 = vmatpush.msra.mxu0 %v191
    %218 = vmatpush.msra.mxu0 %v190
    %219 = vmatpush.msra.mxu0 %v189
    %220 = vmatpush.msra.mxu0 %v188
    %221 = vmatmul.f32.gmra.mxu0 %v187
    %v222 = vpop.f32.mrf.mxu0
    %v223 = vadd.f32 %v204, %v222
    %224 = vdwg.mxu0
    %v225 = vlaneseq
    %v226 = vand.u32 %v225, 127
    %vm227 = vcmp.ge.s32.totalorder %v226, 2
    %vm228 = vcmp.lt.s32.totalorder %v226, 4
    %vm229 = vmand %vm227, %vm228
    %v230 = vmax.f32 %v223, 0.0
    %v231 = vand.u32 2147483647, %v223
    %v232 = vsub.f32 0.0, %v231
    %v233 = vmul.f32 %v232, 1.442695
    %v234 = vpow.pop %v233
    %v235 = vadd.f32 %v234, 1.0
    %v236 = vlog2.pop %v235
    %v237 = vmul.f32 %v236, 0.6931472
    %v238 = vmul.f32 -0.5, %v234
    %v239 = vadd.f32 %v238, 1.0
    %v240 = vmul.f32 %v239, %v234
    %v241 = vand.u32 2147483647, %v234
    %vm242 = vcmp.lt.f32.partialorder %v241, 0.0004427343
    %v243 = vsel %vm242, %v240, %v237
    %v244 = vadd.f32 %v230, %v243
    %v245 = vadd.f32 %v244, 0.05
    %v246 = vsel %vm229, 1, 0
    %vm247 = vcmp.eq.s32.totalorder %v246, 1
    %v248 = vsel %vm247, %v245, %v223
    %vm249 = vcmask 39936
    %250 = vst.msk [vmem:[%s5] sm:$0xff] %vm249, %v248
    // Predicated region
    $region30: #{shared_feature_forward.1} parent=1 // pred_check
      _
    $region31: #{shared_feature_forward.1} parent=1 // pred_check_branch
      %252 = sbr.rel (0) target = $region33
    $region32: #{shared_feature_forward.1} parent=1 // pred_region
      _
    $region33: #{shared_feature_forward.1} parent=1 // pred_fallthru
      _
    // Predicated region
    $region34: #{shared_feature_forward.1} parent=1 // pred_check
      _
    $region35: #{shared_feature_forward.1} parent=1 // pred_check_branch
      %254 = sbr.rel (0) target = $region37
    $region36: #{shared_feature_forward.1} parent=1 // pred_region
      _
    $region37: #{shared_feature_forward.1} parent=1 // pred_fallthru
      _
    %255 = vsyncpa [#allocation3], 1
    %256 = vsyncpa [#allocation5], 1

</llo_original>
